<compile_context>
chip_gen: v5e
topology: v5e:2x2
jax: 0.10.0
libtpu: 0.0.40
codegen_flags: <defaults>
</compile_context>

<pallas_src>
import functools
import math

import numpy as np
import jax
import jax.numpy as jnp
from jax import lax
from jax.experimental import pallas as pl
from jax.experimental.pallas import tpu as pltpu


# ----------------------------------------------------------------------------
# D4 group machinery (weight-expansion glue, plain JAX / Python).
# Element g = m^f * r^k encoded as index 4*f + k, f in {0,1}, k in {0..3}.
# ----------------------------------------------------------------------------
_D4_ELEMS = [(f, k) for f in (0, 1) for k in range(4)]


def _d4_mul(a, b):
    f1, k1 = a
    f2, k2 = b
    sign = -1 if f2 == 1 else 1
    return ((f1 + f2) % 2, (sign * k1 + k2) % 4)


def _d4_inv(a):
    f, k = a
    return (f, (-k) % 4) if f == 0 else (f, k)


def _d4_index(g):
    return 4 * g[0] + g[1]


def _spatial_transform(w, g):
    """Apply g's planar action to the last two (spatial) axes of w."""
    f, k = g
    out = jnp.rot90(w, k=k, axes=(-2, -1))
    if f:
        out = jnp.flip(out, axis=-1)
    return out


def group_expand_weight(weight, gout_order):
    """weight (Cout, Cin, Gin, kh, kw) -> (Cout*Gout, Cin*Gin, kh, kw).

    Regular-representation law: expanded[o, g, i, h] = T_g( w[o, i, g^{-1} h] ).
    """
    # TODO(synk): exact convention of get_transformation_law()/D4_subgroups in
    # the source repo is unavailable; this uses the standard regular-rep D4 law.
    gin_order = weight.shape[2]
    slabs = []
    for g in _D4_ELEMS[:gout_order]:
        g_inv = _d4_inv(g)
        perm = [_d4_index(_d4_mul(g_inv, h)) for h in _D4_ELEMS[:gin_order]]
        w_perm = weight[:, :, jnp.asarray(perm), :, :]
        slabs.append(_spatial_transform(w_perm, g))
    w_exp = jnp.stack(slabs, axis=1)  # (Cout, Gout, Cin, Gin, kh, kw)
    cout, gout, cin, gin, kh, kw = w_exp.shape
    return w_exp.reshape(cout * gout, cin * gin, kh, kw)


def _round_up(x, m):
    return ((x + m - 1) // m) * m


# ----------------------------------------------------------------------------
# Per-layer parameter packing — run ONCE per layer and cache, not per forward.
# ----------------------------------------------------------------------------
def pack_d4_conv_params(weight, bias, *, gout, mxu_dtype=jnp.bfloat16):
    """Returns (w_packed (Cout_e, K_pad), bias_packed (Cout_e, 1) f32).

    K is ordered (ki, kj, c) — matching the wrapper-side im2col concat — and
    zero-padded to a multiple of 128 here (once), so the kernel's contraction
    is fully lane-aligned with no per-step padding work.
    """
    cout, cin, gin, kh, kw = weight.shape
    w_exp = group_expand_weight(weight, gout)          # (Cout_e, Cin_e, kh, kw)
    cout_e = cout * gout
    cin_e = cin * gin
    k_eff = kh * kw * cin_e
    w_mat = jnp.transpose(w_exp, (0, 2, 3, 1)).reshape(cout_e, k_eff)
    k_pad_to = _round_up(k_eff, 128)
    w_mat = jnp.pad(w_mat, ((0, 0), (0, k_pad_to - k_eff)))
    if mxu_dtype is not None:                          # bf16 MXU feed (default)
        w_mat = w_mat.astype(mxu_dtype)
    if bias is None:
        bias = jnp.zeros((cout,), jnp.float32)
    # flattened out-channel index is o*Gout + g -> repeat each bias Gout times.
    bias_packed = jnp.repeat(bias.astype(jnp.float32), gout).reshape(cout_e, 1)
    return w_mat, bias_packed


# ----------------------------------------------------------------------------
# Pallas kernel: pure matmul + bias per (batch, M-strip) grid step.
# ----------------------------------------------------------------------------
def _matmul_bias_kernel(w_ref, b_ref, p_ref, o_ref):
    # (Cout_e, K_pad) @ (K_pad, TILE_M) on the MXU, f32 accumulation in vregs,
    # one bias add, one unmasked lane-dense store (minor dim multiple of 128).
    acc = jnp.dot(w_ref[...], p_ref[...], preferred_element_type=jnp.float32)
    o_ref[...] = (acc + b_ref[...]).astype(o_ref.dtype)


def d4_group_conv2d_packed(x, w_packed, bias_packed, *, kernel_size, padding=0,
                           cout, gout, tile_m=256):
    """Forward of D4GroupConv2d with pre-packed params.

    x: (N, Cin, Gin, H, W)  ->  (N, Cout, Gout, Ho, Wo)
    stride=1, dilation=1, num_channel_groups=1 (the module defaults).
    """
    # TODO(synk): stride>1 / dilation>1 / num_channel_groups>1 paths not wired
    # into the Pallas kernel (module defaults are 1/1/1).
    n, cin, gin, h, w = x.shape
    kh = kw = kernel_size
    p = padding
    cin_e = cin * gin
    cout_e, k_pad_to = w_packed.shape
    k_eff = kh * kw * cin_e
    ho = h + 2 * p - kh + 1
    wo = w + 2 * p - kw + 1
    m = ho * wo
    tile = min(tile_m, _round_up(m, 128))
    m_pad = _round_up(m, tile)

    # ---- wrapper-side im2col (XLA): patches are laid out K-major so the
    # kernel sees a lane-dense (K_pad, TILE_M) block per step and the result
    # comes out directly in PyTorch-contiguous (N, Cout_e, Ho*Wo) order.
    # The ~kh*kw read amplification is negligible HBM traffic at these sizes.
    x_flat = x.reshape(n, cin_e, h, w)                       # free reshape
    x_p = jnp.pad(x_flat, ((0, 0), (0, 0), (p, p), (p, p)))
    cols = [x_p[:, :, ki:ki + ho, kj:kj + wo]
            for ki in range(kh) for kj in range(kw)]
    patches = jnp.concatenate(cols, axis=1).reshape(n, k_eff, m)
    patches = jnp.pad(patches, ((0, 0), (0, k_pad_to - k_eff), (0, m_pad - m)))
    patches = patches.astype(w_packed.dtype)                 # bf16 MXU feed

    grid = (n, m_pad // tile)
    flops = 2 * n * m_pad * k_pad_to * cout_e
    bytes_accessed = int(patches.size * patches.dtype.itemsize
                         + w_packed.size * w_packed.dtype.itemsize
                         + bias_packed.size * 4
                         + n * cout_e * m_pad * jnp.dtype(x.dtype).itemsize)

    out = pl.pallas_call(
        _matmul_bias_kernel,
        out_shape=jax.ShapeDtypeStruct((n, cout_e, m_pad), x.dtype),
        grid_spec=pltpu.PrefetchScalarGridSpec(
            num_scalar_prefetch=0,
            grid=grid,
            in_specs=[
                pl.BlockSpec((cout_e, k_pad_to), lambda b, mi: (0, 0)),
                pl.BlockSpec((cout_e, 1), lambda b, mi: (0, 0)),
                pl.BlockSpec((None, k_pad_to, tile), lambda b, mi: (b, 0, mi)),
            ],
            out_specs=pl.BlockSpec((None, cout_e, tile),
                                   lambda b, mi: (b, 0, mi)),
        ),
        compiler_params=pltpu.CompilerParams(
            dimension_semantics=("parallel", "parallel")),
        cost_estimate=pl.CostEstimate(flops=flops, transcendentals=0,
                                      bytes_accessed=bytes_accessed),
    )(w_packed, bias_packed, patches)

    # (N, Cout_e, M) -> (N, Cout, Gout, Ho, Wo): contiguous reshape, no copy.
    out = out[:, :, :m].reshape(n, cout, gout, ho, wo)
    return out


def d4_group_conv2d(x, weight, bias, *, kernel_size, padding=0,
                    mxu_dtype=jnp.bfloat16, tile_m=256):
    """One-shot convenience wrapper (re-packs weights every call; prefer
    pack_d4_conv_params + d4_group_conv2d_packed with per-layer caching)."""
    gout = x.shape[2]
    w_packed, b_packed = pack_d4_conv_params(weight, bias, gout=gout,
                                             mxu_dtype=mxu_dtype)
    return d4_group_conv2d_packed(x, w_packed, b_packed,
                                  kernel_size=kernel_size, padding=padding,
                                  cout=weight.shape[0], gout=gout,
                                  tile_m=tile_m)


if __name__ == "__main__":
    # Small config: in_group=out_group='d4' (order 8), in_ch=out_ch=4, k=3, pad=1
    n, cin, cout, gin, hw, ksize, pad = 2, 4, 4, 8, 16, 3, 1

    key = jax.random.PRNGKey(0)
    kx, kw_, kb = jax.random.split(key, 3)

    # Deterministic init mirroring reset_parameters(): kaiming_uniform with
    # a=sqrt(5) on the (Cin*Gin)-flattened weight == U(-1/sqrt(fan_in), +).
    fan_in = cin * gin * ksize * ksize
    bound = 1.0 / math.sqrt(fan_in)
    weight = jax.random.uniform(kw_, (cout, cin, gin, ksize, ksize),
                                minval=-bound, maxval=bound, dtype=jnp.float32)
    bias = jax.random.uniform(kb, (cout,), minval=-bound, maxval=bound,
                              dtype=jnp.float32)
    x = jax.random.normal(kx, (n, cin, gin, hw, hw), dtype=jnp.float32)

    # Per-layer packing hoisted out of the forward path (cached across calls).
    w_packed, b_packed = pack_d4_conv_params(weight, bias, gout=gin,
                                             mxu_dtype=jnp.bfloat16)
    fwd = jax.jit(functools.partial(d4_group_conv2d_packed,
                                    kernel_size=ksize, padding=pad,
                                    cout=cout, gout=gin))
    out = jax.block_until_ready(fwd(x, w_packed, b_packed))

    # Reference: XLA conv with the same group-expanded weight, fed bf16 with
    # f32 accumulation to mirror the kernel's MXU numerics exactly.
    w_exp_ref = group_expand_weight(weight, gin)
    ref = lax.conv_general_dilated(
        x.reshape(n, cin * gin, hw, hw).astype(jnp.bfloat16),
        w_exp_ref.astype(jnp.bfloat16),
        window_strides=(1, 1), padding=((pad, pad), (pad, pad)),
        dimension_numbers=("NCHW", "OIHW", "NCHW"),
        preferred_element_type=jnp.float32)
    ref = ref.reshape(n, cout, gin, *ref.shape[-2:]) + bias.reshape(1, -1, 1, 1, 1)

    assert out.shape == ref.shape == (n, cout, gin, hw, hw)
    np.testing.assert_allclose(np.asarray(out), np.asarray(ref),
                               rtol=1e-3, atol=1e-3)
    print("KERNEL_OK")
</pallas_src>

<mosaic_0001>
module attributes {stable_mosaic.version = 11 : i64} {
  func.func @_matmul_bias_kernel(%arg0: i32, %arg1: i32, %arg2: memref<32x384xbf16, #tpu.memory_space<vmem>>, %arg3: memref<32x1xf32, #tpu.memory_space<vmem>>, %arg4: memref<1x384x256xbf16, #tpu.memory_space<vmem>>, %arg5: memref<1x32x256xf32, #tpu.memory_space<vmem>>) attributes {dimension_semantics = [#tpu.dimension_semantics<parallel>, #tpu.dimension_semantics<parallel>], iteration_bounds = array<i64: 2, 1>, scalar_prefetch = 0 : i64, scratch_operands = 0 : i64, tpu.core_type = #tpu.core_type<tc>, window_params = [{pipeline_mode = #tpu.pipeline_mode<synchronous>, transform_indices = @transform_0, window_bounds = array<i64: 32, 384>}, {pipeline_mode = #tpu.pipeline_mode<synchronous>, transform_indices = @transform_1, window_bounds = array<i64: 32, 1>}, {transform_indices = @transform_2, window_bounds = array<i64: 1, 384, 256>}, {transform_indices = @transform_3, window_bounds = array<i64: 1, 32, 256>}]} {
    %c0 = arith.constant 0 : index
    %c0_0 = arith.constant 0 : index
    %0 = vector.load %arg2[%c0, %c0_0] : memref<32x384xbf16, #tpu.memory_space<vmem>>, vector<32x384xbf16>
    %c0_1 = arith.constant 0 : index
    %c0_2 = arith.constant 0 : index
    %c0_3 = arith.constant 0 : index
    %1 = vector.load %arg4[%c0_1, %c0_2, %c0_3] : memref<1x384x256xbf16, #tpu.memory_space<vmem>>, vector<1x384x256xbf16>
    %2 = vector.shape_cast %1 : vector<1x384x256xbf16> to vector<384x256xbf16>
    %cst = arith.constant dense<0.000000e+00> : vector<32x256xf32>
    %3 = tpu.matmul %0, %2, %cst {dimension_numbers = #tpu.dot_dimension_numbers<[1], [0], [0], [1], [0, 0, 1, 1], [], []>} : vector<32x384xbf16>, vector<384x256xbf16>, vector<32x256xf32> -> vector<32x256xf32>
    %c0_4 = arith.constant 0 : index
    %c0_5 = arith.constant 0 : index
    %4 = vector.load %arg3[%c0_4, %c0_5] : memref<32x1xf32, #tpu.memory_space<vmem>>, vector<32x1xf32>
    %5 = vector.broadcast %4 : vector<32x1xf32> to vector<32x256xf32>
    %6 = arith.addf %3, %5 : vector<32x256xf32>
    %c0_6 = arith.constant 0 : index
    %c0_7 = arith.constant 0 : index
    %c0_8 = arith.constant 0 : index
    %7 = vector.load %arg5[%c0_6, %c0_7, %c0_8] : memref<1x32x256xf32, #tpu.memory_space<vmem>>, vector<1x32x256xf32>
    %8 = vector.shape_cast %7 : vector<1x32x256xf32> to vector<32x256xf32>
    %9 = vector.shape_cast %6 : vector<32x256xf32> to vector<1x32x256xf32>
    tpu.vector_store %arg5[%c0_6, %c0_7, %c0_8], %9 {strides = array<i32>} : memref<1x32x256xf32, #tpu.memory_space<vmem>>, vector<1x32x256xf32>,
    return
  }
  func.func @transform_0(%arg0: i32, %arg1: i32) -> (i32, i32) {
    %c0_i32 = arith.constant 0 : i32
    %c0_i32_0 = arith.constant 0 : i32
    %c0_i32_1 = arith.constant 0 : i32
    return %c0_i32, %c0_i32_0 : i32, i32
  }
  func.func @transform_1(%arg0: i32, %arg1: i32) -> (i32, i32) {
    %c0_i32 = arith.constant 0 : i32
    %c0_i32_0 = arith.constant 0 : i32
    %c0_i32_1 = arith.constant 0 : i32
    return %c0_i32, %c0_i32_0 : i32, i32
  }
  func.func @transform_2(%arg0: i32, %arg1: i32) -> (i32, i32, i32) {
    %c0_i32 = arith.constant 0 : i32
    %c0_i32_0 = arith.constant 0 : i32
    return %arg0, %c0_i32, %arg1 : i32, i32, i32
  }
  func.func @transform_3(%arg0: i32, %arg1: i32) -> (i32, i32, i32) {
    %c0_i32 = arith.constant 0 : i32
    %c0_i32_0 = arith.constant 0 : i32
    return %arg0, %c0_i32, %arg1 : i32, i32, i32
  }
}

</mosaic_0001>

<llo_original>
// kernel: d4_group_conv2d_packed.1
$region0: #{d4_group_conv2d_packed.1}
  #allocation0 [shape = 'u32[]', space=smem, size = 0x4, offset = 0x4, fixed_abs, tag = 'smem constant byte address 0x4 - core index']
  #allocation1 [shape = 'u32[72,128]{1,0:T(1,128)}', space=vmem, size = 0x9000, scoped, tag = 'internal scratch']
  %s0 = inlined_call_operand.vmem [shape: bf16[32,384], index: 0, kind: input, shape index: {}]
  %s1 = inlined_call_operand.vmem [shape: f32[32,1], index: 1, kind: input, shape index: {}]
  %s2 = inlined_call_operand.vmem [shape: bf16[2,384,256], index: 2, kind: input, shape index: {}]
  %s3 = inlined_call_operand.vmem [shape: f32[2,32,256], index: 3, kind: output, shape index: {}]
  %s4 = sld [smem:[#allocation0]]
  $region45: #{d4_group_conv2d_packed.1} parent=0
    _
  %s6 = ssub.s32 1, %s4
  %s7 = scalar_select 0, %s6, %s4
  loop: start=0, step=1, limit=4
  $region2: #{d4_group_conv2d_packed.1} parent=0 // loop_pre_header
    _
  $region3: #{d4_group_conv2d_packed.1} parent=0 // loop_header
    %s9 = sphi 0, %s13
    %p10 = scmp.ge.s32.totalorder %s9, 4
    %s16 = sphi 0, %s28
    %s17 = sphi 0, %s24
    %s18 = sphi 0, %s16
    %s19 = sphi 0, %s17
    %s20 = sphi 0, %s18
    %s21 = sphi 0, %s19
    %s29 = sphi 0, %s29
    %s31 = sphi 0, %s29
    %s32 = sphi 0, %s31
    %s46 = sphi 0, %s32
    %s50 = sphi 0, %s50
    %s52 = sphi 0, %s50
    %s53 = sphi 0, %s52
    %s67 = sphi 0, %s53
    %s75 = sphi 0, %s77
    %s78 = sphi 0, %s75
    %s79 = sphi 0, %s78
    %s95 = sphi 0, %s79
    %s103 = sphi 0, %s105
    %s106 = sphi 0, %s103
    %s107 = sphi 0, %s106
    %s123 = sphi 0, %s107
  $region4: #{d4_group_conv2d_packed.1} parent=0 // loop_header_branch
    %12 = sbr.rel (%p10) target = $region8
  $region5: #{d4_group_conv2d_packed.1} parent=0 // loop_body
    %s14 = ssub.s32 %s9, 1
    %s15 = ssub.s32 %s9, 2
    %s22 = sadd.s32 1, %s17
    %p23 = scmp.ge.s32.totalorder %s22, 1
    %s24 = scalar_select %p23, 0, %s22
    %s25 = sadd.s32 1, %s16
    %s26 = scalar_select %p23, %s25, %s16
    %p27 = scmp.ge.s32.totalorder %s26, 2
    %s28 = scalar_select %p27, 0, %s26
    %s30 = sadd.s32 %s29, 1
    %p33 = scmp.eq.s32.totalorder %s9, 1
    %p34 = scmp.ne.s32.totalorder %s29, %s31
    %p35 = scmp.eq.s32.totalorder %s9, 0
    %p36 = por %p34, %p35
    %p37 = scmp.ne.s32.totalorder %s29, %s31
    %p38 = scmp.eq.s32.totalorder %s14, 1
    %p39 = por %p37, %p38
    %p40 = scmp.ne.s32.totalorder %s31, %s32
    %p41 = scmp.eq.s32.totalorder %s14, 0
    %p42 = por %p40, %p41
    %p43 = scmp.ne.s32.totalorder %s31, %s32
    %p44 = scmp.eq.s32.totalorder %s15, 1
    %p45 = por %p43, %p44
    %p47 = scmp.ne.s32.totalorder %s32, %s46
    %p48 = scmp.eq.s32.totalorder %s15, 0
    %p49 = por %p47, %p48
    %s51 = sadd.s32 %s50, 1
    %p54 = scmp.eq.s32.totalorder %s9, 1
    %p55 = scmp.ne.s32.totalorder %s50, %s52
    %p56 = scmp.eq.s32.totalorder %s9, 0
    %p57 = por %p55, %p56
    %p58 = scmp.ne.s32.totalorder %s50, %s52
    %p59 = scmp.eq.s32.totalorder %s14, 1
    %p60 = por %p58, %p59
    %p61 = scmp.ne.s32.totalorder %s52, %s53
    %p62 = scmp.eq.s32.totalorder %s14, 0
    %p63 = por %p61, %p62
    %p64 = scmp.ne.s32.totalorder %s52, %s53
    %p65 = scmp.eq.s32.totalorder %s15, 1
    %p66 = por %p64, %p65
    %p68 = scmp.ne.s32.totalorder %s53, %s67
    %p69 = scmp.eq.s32.totalorder %s15, 0
    %p70 = por %p68, %p69
    %s71 = ssub.s32 %s16, %s28
    %s72 = ssub.s32 %s17, %s24
    %s73 = sor.u32 %s71, %s72
    %p74 = scmp.eq.s32.totalorder %s73, 0
    %s76 = sadd.s32 %s75, 1
    %s77 = scalar_select %p74, %s75, %s76
    %p80 = pneg %p74
    %p81 = scmp.eq.s32.totalorder %s9, 1
    %p82 = por %p80, %p81
    %p83 = scmp.ne.s32.totalorder %s75, %s78
    %p84 = scmp.eq.s32.totalorder %s9, 0
    %p85 = por %p83, %p84
    %p86 = scmp.ne.s32.totalorder %s75, %s78
    %p87 = scmp.eq.s32.totalorder %s14, 1
    %p88 = por %p86, %p87
    %p89 = scmp.ne.s32.totalorder %s78, %s79
    %p90 = scmp.eq.s32.totalorder %s14, 0
    %p91 = por %p89, %p90
    %p92 = scmp.ne.s32.totalorder %s78, %s79
    %p93 = scmp.eq.s32.totalorder %s15, 1
    %p94 = por %p92, %p93
    %p96 = scmp.ne.s32.totalorder %s79, %s95
    %p97 = scmp.eq.s32.totalorder %s15, 0
    %p98 = por %p96, %p97
    %s99 = ssub.s32 %s16, %s28
    %s100 = ssub.s32 %s17, %s24
    %s101 = sor.u32 %s99, %s100
    %p102 = scmp.eq.s32.totalorder %s101, 0
    %s104 = sadd.s32 %s103, 1
    %s105 = scalar_select %p102, %s103, %s104
    %p108 = pneg %p102
    %p109 = scmp.eq.s32.totalorder %s9, 1
    %p110 = por %p108, %p109
    %p111 = scmp.ne.s32.totalorder %s103, %s106
    %p112 = scmp.eq.s32.totalorder %s9, 0
    %p113 = por %p111, %p112
    %p114 = scmp.ne.s32.totalorder %s103, %s106
    %p115 = scmp.eq.s32.totalorder %s14, 1
    %p116 = por %p114, %p115
    %p117 = scmp.ne.s32.totalorder %s106, %s107
    %p118 = scmp.eq.s32.totalorder %s14, 0
    %p119 = por %p117, %p118
    %p120 = scmp.ne.s32.totalorder %s106, %s107
    %p121 = scmp.eq.s32.totalorder %s15, 1
    %p122 = por %p120, %p121
    %p124 = scmp.ne.s32.totalorder %s107, %s123
    %p125 = scmp.eq.s32.totalorder %s15, 0
    %p126 = por %p124, %p125
    %p127 = scmp.le.s32.totalorder 1, %s9
    %p128 = scmp.lt.s32.totalorder %s9, 3
    %p129 = pnand %p127, %p128
    %p130 = pneg %p129
    // Predicated region
    $region9: #{d4_group_conv2d_packed.1} parent=5 // pred_check
      _
    $region10: #{d4_group_conv2d_packed.1} parent=5 // pred_check_branch
      %132 = sbr.rel (%p129) target = $region12
    $region11: #{d4_group_conv2d_packed.1} parent=5 // pred_region
      %s133 = ssub.s32 %s9, 1
      // Predicated region
      $region13: #{d4_group_conv2d_packed.1} parent=11 // pred_check
        %p134 = pneg %p42
      $region14: #{d4_group_conv2d_packed.1} parent=11 // pred_check_branch
        %136 = sbr.rel (%p134) target = $region16
      $region15: #{d4_group_conv2d_packed.1} parent=11 // pred_region
        _
      $region16: #{d4_group_conv2d_packed.1} parent=11 // pred_fallthru
        _
      // Predicated region
      $region17: #{d4_group_conv2d_packed.1} parent=11 // pred_check
        %p137 = pneg %p63
      $region18: #{d4_group_conv2d_packed.1} parent=11 // pred_check_branch
        %139 = sbr.rel (%p137) target = $region20
      $region19: #{d4_group_conv2d_packed.1} parent=11 // pred_region
        _
      $region20: #{d4_group_conv2d_packed.1} parent=11 // pred_fallthru
        _
    $region12: #{d4_group_conv2d_packed.1} parent=5 // pred_fallthru
      _
    %p140 = scmp.lt.s32.totalorder %s9, 2
    // Predicated region
    $region21: #{d4_group_conv2d_packed.1} parent=5 // pred_check
      %p141 = pneg %p140
    $region22: #{d4_group_conv2d_packed.1} parent=5 // pred_check_branch
      %143 = sbr.rel (%p141) target = $region24
    $region23: #{d4_group_conv2d_packed.1} parent=5 // pred_region
      // Predicated region
      $region25: #{d4_group_conv2d_packed.1} parent=23 // pred_check
        %p144 = pneg %p85
      $region26: #{d4_group_conv2d_packed.1} parent=23 // pred_check_branch
        %146 = sbr.rel (%p144) target = $region28
      $region27: #{d4_group_conv2d_packed.1} parent=23 // pred_region
        %s147 = smul.u32 2, %s17
        %p148 = scmp.lt.s32.totalorder %s16, 1
        %s149 = scalar_select %p148, %s16, 1
        %p150 = scmp.lt.s32.totalorder %s147, 1
        %s151 = scalar_select %p150, %s147, 1
        %s152 = smul.addr %s149, 96
        %s153 = sadd.s32 %s151, %s152
        %s154 = smul.addr %s153, 4
        %s155 = scalar_lea.vmem %s2, %s154
        %s156 = smul.u32 2, %s17
      $region28: #{d4_group_conv2d_packed.1} parent=23 // pred_fallthru
        _
    $region24: #{d4_group_conv2d_packed.1} parent=5 // pred_fallthru
      _
    %p157 = scmp.le.s32.totalorder 1, %s9
    %p158 = scmp.lt.s32.totalorder %s9, 3
    %p159 = pnand %p157, %p158
    %p160 = pneg %p159
    // Predicated region
    $region29: #{d4_group_conv2d_packed.1} parent=5 // pred_check
      _
    $region30: #{d4_group_conv2d_packed.1} parent=5 // pred_check_branch
      %162 = sbr.rel (%p159) target = $region32
    $region31: #{d4_group_conv2d_packed.1} parent=5 // pred_region
      %s163 = ssub.s32 %s9, 1
      %p164 = pneg %p42
      %p165 = pneg %p39
      %p166 = pneg %p63
      %p167 = pneg %p60
      %s168 = smul.u32 2, %s19
      %p169 = scmp.lt.s32.totalorder %s18, 1
      %s170 = scalar_select %p169, %s18, 1
      %p171 = scmp.lt.s32.totalorder %s168, 1
      %s172 = scalar_select %p171, %s168, 1
      %s173 = smul.addr %s170, 96
      %s174 = sadd.s32 %s172, %s173
      %s175 = smul.addr %s174, 4
      %s176 = scalar_lea.vmem %s2, %s175
      %p177 = pneg %p91
      %p178 = pneg %p88
      %p179 = pneg %p119
      %p180 = pneg %p116
      %s181 = smul.u32 2, %s19
      %p182 = scmp.lt.s32.totalorder %s18, 1
      %s183 = scalar_select %p182, %s18, 1
      %p184 = scmp.lt.s32.totalorder %s181, 1
      %s185 = scalar_select %p184, %s181, 1
      %s186 = smul.addr %s183, 8
      %s187 = sadd.s32 %s185, %s186
      %s188 = smul.addr %s187, 8
      %s189 = scalar_lea.vmem %s3, %s188
      %s190 = smul.u32 2, %s19
      %p191 = scmp.lt.s32.totalorder %s18, 1
      %s192 = scalar_select %p191, %s18, 1
      %p193 = scmp.lt.s32.totalorder %s190, 1
      %s194 = scalar_select %p193, %s190, 1
      %s195 = smul.addr %s192, 96
      %s196 = sadd.s32 %s194, %s195
      %s197 = smul.addr %s196, 4
      %s198 = scalar_lea.vmem %s2, %s197
      %s199 = smul.u32 2, %s19
      %s200 = smul.u32 2, %s19
      %p201 = scmp.lt.s32.totalorder %s18, 1
      %s202 = scalar_select %p201, %s18, 1
      %p203 = scmp.lt.s32.totalorder %s200, 1
      %s204 = scalar_select %p203, %s200, 1
      %s205 = smul.addr %s202, 8
      %s206 = sadd.s32 %s204, %s205
      %s207 = smul.addr %s206, 8
      %s208 = scalar_lea.vmem %s3, %s207
      %s209 = smul.u32 2, %s19
      %v210 = vld [vmem:[%s0] sm:$0xff]
      %v211 = vld [vmem:[%s0 + $0x8] sm:$0xf]
      %v212 = vld [vmem:[%s0 + $0xc] sm:$0xff]
      %v213 = vld [vmem:[%s0 + $0x14] sm:$0xf]
      %v214 = vld [vmem:[%s0 + $0x18] sm:$0xff]
      %v215 = vld [vmem:[%s0 + $0x20] sm:$0xf]
      %v216 = vld [vmem:[%s0 + $0x24] sm:$0xff]
      %v217 = vld [vmem:[%s0 + $0x2c] sm:$0xf]
      %v218 = vld [vmem:[%s198] sm:$0xff]
      %v219 = vld [vmem:[%s198 + $0x8] sm:$0xff]
      %v220 = vld [vmem:[%s198 + $0x10] sm:$0xff]
      %v221 = vld [vmem:[%s198 + $0x18] sm:$0xff]
      %v222 = vld [vmem:[%s198 + $0x20] sm:$0xff]
      %v223 = vld [vmem:[%s198 + $0x28] sm:$0xff]
      %v224 = vld [vmem:[%s198 + $0x30] sm:$0xff]
      %v225 = vld [vmem:[%s198 + $0x38] sm:$0xff]
      %v226 = vld [vmem:[%s198 + $0x40] sm:$0xff]
      %v227 = vld [vmem:[%s198 + $0x48] sm:$0xff]
      %v228 = vld [vmem:[%s198 + $0x50] sm:$0xff]
      %v229 = vld [vmem:[%s198 + $0x58] sm:$0xff]
      %v230 = vld [vmem:[%s198 + $0x60] sm:$0xff]
      %v231 = vld [vmem:[%s198 + $0x68] sm:$0xff]
      %v232 = vld [vmem:[%s198 + $0x70] sm:$0xff]
      %v233 = vld [vmem:[%s198 + $0x78] sm:$0xff]
      %v234 = vld [vmem:[%s198 + $0x80] sm:$0xff]
      %v235 = vld [vmem:[%s198 + $0x88] sm:$0xff]
      %v236 = vld [vmem:[%s198 + $0x90] sm:$0xff]
      %v237 = vld [vmem:[%s198 + $0x98] sm:$0xff]
      %v238 = vld [vmem:[%s198 + $0xa0] sm:$0xff]
      %v239 = vld [vmem:[%s198 + $0xa8] sm:$0xff]
      %v240 = vld [vmem:[%s198 + $0xb0] sm:$0xff]
      %v241 = vld [vmem:[%s198 + $0xb8] sm:$0xff]
      %v242 = vld [vmem:[%s198 + $0xc0] sm:$0xff]
      %v243 = vld [vmem:[%s198 + $0xc8] sm:$0xff]
      %v244 = vld [vmem:[%s198 + $0xd0] sm:$0xff]
      %v245 = vld [vmem:[%s198 + $0xd8] sm:$0xff]
      %v246 = vld [vmem:[%s198 + $0xe0] sm:$0xff]
      %v247 = vld [vmem:[%s198 + $0xe8] sm:$0xff]
      %v248 = vld [vmem:[%s198 + $0xf0] sm:$0xff]
      %v249 = vld [vmem:[%s198 + $0xf8] sm:$0xff]
      %v250 = vld [vmem:[%s198 + $0x100] sm:$0xff]
      %v251 = vld [vmem:[%s198 + $0x108] sm:$0xff]
      %v252 = vld [vmem:[%s198 + $0x110] sm:$0xff]
      %v253 = vld [vmem:[%s198 + $0x118] sm:$0xff]
      %v254 = vld [vmem:[%s198 + $0x120] sm:$0xff]
      %v255 = vld [vmem:[%s198 + $0x128] sm:$0xff]
      %v256 = vld [vmem:[%s198 + $0x130] sm:$0xff]
      %v257 = vld [vmem:[%s198 + $0x138] sm:$0xff]
      %v258 = vld [vmem:[%s198 + $0x140] sm:$0xff]
      %v259 = vld [vmem:[%s198 + $0x148] sm:$0xff]
      %v260 = vld [vmem:[%s198 + $0x150] sm:$0xff]
      %v261 = vld [vmem:[%s198 + $0x158] sm:$0xff]
      %v262 = vld [vmem:[%s198 + $0x160] sm:$0xff]
      %v263 = vld [vmem:[%s198 + $0x168] sm:$0xff]
      %v264 = vld [vmem:[%s198 + $0x170] sm:$0xff]
      %v265 = vld [vmem:[%s198 + $0x178] sm:$0xff]
      %v266 = vld [vmem:[%s1] sm:$0xff]
      %v267 = vld [vmem:[%s1 + $0x8] sm:$0xff]
      %v268 = vld [vmem:[%s1 + $0x10] sm:$0xff]
      %v269 = vld [vmem:[%s1 + $0x18] sm:$0xff]
      %271 = vset.pattern.permute.xlu0 0
      %272 = vperm.xlu0 %271, %v266
      %v273 = vpop.permute.xlu0 %272
      %276 = vset.pattern.permute.xlu0 0
      %277 = vperm.xlu0 %276, %v267
      %v278 = vpop.permute.xlu0 %277
      %281 = vset.pattern.permute.xlu0 0
      %282 = vperm.xlu0 %281, %v268
      %v283 = vpop.permute.xlu0 %282
      %286 = vset.pattern.permute.xlu0 0
      %287 = vperm.xlu0 %286, %v269
      %v288 = vpop.permute.xlu0 %287
      %v298 = vunpack.c.l.b16 %v210
      %v299 = vunpack.c.h.b16 %v210
      %v300 = vunpack.c.l.b16 %v211
      %v301 = vunpack.c.l.b16 %v212
      %v302 = vunpack.c.h.b16 %v212
      %v303 = vunpack.c.l.b16 %v213
      %v304 = vunpack.c.l.b16 %v214
      %v305 = vunpack.c.h.b16 %v214
      %v306 = vunpack.c.l.b16 %v215
      %v307 = vunpack.c.l.b16 %v216
      %v308 = vunpack.c.h.b16 %v216
      %v309 = vunpack.c.l.b16 %v217
      %v310 = vpack.c.b16 %v301, %v298
      %v311 = vpack.c.b16 %v302, %v299
      %v312 = vpack.c.b16 %v303, %v300
      %v313 = vpack.c.b16 %v307, %v304
      %v314 = vpack.c.b16 %v308, %v305
      %v315 = vpack.c.b16 %v309, %v306
      %v370 = vunpack.c.l.b16 %v218
      %v371 = vunpack.c.h.b16 %v218
      %v372 = vunpack.c.l.b16 %v219
      %v373 = vunpack.c.h.b16 %v219
      %v374 = vunpack.c.l.b16 %v220
      %v375 = vunpack.c.h.b16 %v220
      %v376 = vunpack.c.l.b16 %v221
      %v377 = vunpack.c.h.b16 %v221
      %v378 = vunpack.c.l.b16 %v222
      %v379 = vunpack.c.h.b16 %v222
      %v380 = vunpack.c.l.b16 %v223
      %v381 = vunpack.c.h.b16 %v223
      %v382 = vunpack.c.l.b16 %v224
      %v383 = vunpack.c.h.b16 %v224
      %v384 = vunpack.c.l.b16 %v225
      %v385 = vunpack.c.h.b16 %v225
      %v386 = vunpack.c.l.b16 %v226
      %v387 = vunpack.c.h.b16 %v226
      %v388 = vunpack.c.l.b16 %v227
      %v389 = vunpack.c.h.b16 %v227
      %v390 = vunpack.c.l.b16 %v228
      %v391 = vunpack.c.h.b16 %v228
      %v392 = vunpack.c.l.b16 %v229
      %v393 = vunpack.c.h.b16 %v229
      %v394 = vunpack.c.l.b16 %v230
      %v395 = vunpack.c.h.b16 %v230
      %v396 = vunpack.c.l.b16 %v231
      %v397 = vunpack.c.h.b16 %v231
      %v398 = vunpack.c.l.b16 %v232
      %v399 = vunpack.c.h.b16 %v232
      %v400 = vunpack.c.l.b16 %v233
      %v401 = vunpack.c.h.b16 %v233
      %v402 = vunpack.c.l.b16 %v234
      %v403 = vunpack.c.h.b16 %v234
      %v404 = vunpack.c.l.b16 %v235
      %v405 = vunpack.c.h.b16 %v235
      %v406 = vunpack.c.l.b16 %v236
      %v407 = vunpack.c.h.b16 %v236
      %v408 = vunpack.c.l.b16 %v237
      %v409 = vunpack.c.h.b16 %v237
      %v410 = vunpack.c.l.b16 %v238
      %v411 = vunpack.c.h.b16 %v238
      %v412 = vunpack.c.l.b16 %v239
      %v413 = vunpack.c.h.b16 %v239
      %v414 = vunpack.c.l.b16 %v240
      %v415 = vunpack.c.h.b16 %v240
      %v416 = vunpack.c.l.b16 %v241
      %v417 = vunpack.c.h.b16 %v241
      %v418 = vunpack.c.l.b16 %v242
      %v419 = vunpack.c.h.b16 %v242
      %v420 = vunpack.c.l.b16 %v243
      %v421 = vunpack.c.h.b16 %v243
      %v422 = vunpack.c.l.b16 %v244
      %v423 = vunpack.c.h.b16 %v244
      %v424 = vunpack.c.l.b16 %v245
      %v425 = vunpack.c.h.b16 %v245
      %v426 = vunpack.c.l.b16 %v246
      %v427 = vunpack.c.h.b16 %v246
      %v428 = vunpack.c.l.b16 %v247
      %v429 = vunpack.c.h.b16 %v247
      %v430 = vunpack.c.l.b16 %v248
      %v431 = vunpack.c.h.b16 %v248
      %v432 = vunpack.c.l.b16 %v249
      %v433 = vunpack.c.h.b16 %v249
      %v434 = vunpack.c.l.b16 %v250
      %v435 = vunpack.c.h.b16 %v250
      %v436 = vunpack.c.l.b16 %v251
      %v437 = vunpack.c.h.b16 %v251
      %v438 = vunpack.c.l.b16 %v252
      %v439 = vunpack.c.h.b16 %v252
      %v440 = vunpack.c.l.b16 %v253
      %v441 = vunpack.c.h.b16 %v253
      %v442 = vunpack.c.l.b16 %v254
      %v443 = vunpack.c.h.b16 %v254
      %v444 = vunpack.c.l.b16 %v255
      %v445 = vunpack.c.h.b16 %v255
      %v446 = vunpack.c.l.b16 %v256
      %v447 = vunpack.c.h.b16 %v256
      %v448 = vunpack.c.l.b16 %v257
      %v449 = vunpack.c.h.b16 %v257
      %v450 = vunpack.c.l.b16 %v258
      %v451 = vunpack.c.h.b16 %v258
      %v452 = vunpack.c.l.b16 %v259
      %v453 = vunpack.c.h.b16 %v259
      %v454 = vunpack.c.l.b16 %v260
      %v455 = vunpack.c.h.b16 %v260
      %v456 = vunpack.c.l.b16 %v261
      %v457 = vunpack.c.h.b16 %v261
      %v458 = vunpack.c.l.b16 %v262
      %v459 = vunpack.c.h.b16 %v262
      %v460 = vunpack.c.l.b16 %v263
      %v461 = vunpack.c.h.b16 %v263
      %v462 = vunpack.c.l.b16 %v264
      %v463 = vunpack.c.h.b16 %v264
      %v464 = vunpack.c.l.b16 %v265
      %v465 = vunpack.c.h.b16 %v265
      %v466 = vpack.c.b16 %v372, %v370
      %v467 = vpack.c.b16 %v373, %v371
      %v468 = vpack.c.b16 %v376, %v374
      %v469 = vpack.c.b16 %v377, %v375
      %v470 = vpack.c.b16 %v380, %v378
      %v471 = vpack.c.b16 %v381, %v379
      %v472 = vpack.c.b16 %v384, %v382
      %v473 = vpack.c.b16 %v385, %v383
      %v474 = vpack.c.b16 %v388, %v386
      %v475 = vpack.c.b16 %v389, %v387
      %v476 = vpack.c.b16 %v392, %v390
      %v477 = vpack.c.b16 %v393, %v391
      %v478 = vpack.c.b16 %v396, %v394
      %v479 = vpack.c.b16 %v397, %v395
      %v480 = vpack.c.b16 %v400, %v398
      %v481 = vpack.c.b16 %v401, %v399
      %v482 = vpack.c.b16 %v404, %v402
      %v483 = vpack.c.b16 %v405, %v403
      %v484 = vpack.c.b16 %v408, %v406
      %v485 = vpack.c.b16 %v409, %v407
      %v486 = vpack.c.b16 %v412, %v410
      %v487 = vpack.c.b16 %v413, %v411
      %v488 = vpack.c.b16 %v416, %v414
      %v489 = vpack.c.b16 %v417, %v415
      %v490 = vpack.c.b16 %v420, %v418
      %v491 = vpack.c.b16 %v421, %v419
      %v492 = vpack.c.b16 %v424, %v422
      %v493 = vpack.c.b16 %v425, %v423
      %v494 = vpack.c.b16 %v428, %v426
      %v495 = vpack.c.b16 %v429, %v427
      %v496 = vpack.c.b16 %v432, %v430
      %v497 = vpack.c.b16 %v433, %v431
      %v498 = vpack.c.b16 %v436, %v434
      %v499 = vpack.c.b16 %v437, %v435
      %v500 = vpack.c.b16 %v440, %v438
      %v501 = vpack.c.b16 %v441, %v439
      %v502 = vpack.c.b16 %v444, %v442
      %v503 = vpack.c.b16 %v445, %v443
      %v504 = vpack.c.b16 %v448, %v446
      %v505 = vpack.c.b16 %v449, %v447
      %v506 = vpack.c.b16 %v452, %v450
      %v507 = vpack.c.b16 %v453, %v451
      %v508 = vpack.c.b16 %v456, %v454
      %v509 = vpack.c.b16 %v457, %v455
      %v510 = vpack.c.b16 %v460, %v458
      %v511 = vpack.c.b16 %v461, %v459
      %v512 = vpack.c.b16 %v464, %v462
      %v513 = vpack.c.b16 %v465, %v463
      %562 = vmatpush.bf16.msra.mxu0 %v480
      %563 = vmatpush.bf16.msra.mxu0 %v478
      %564 = vmatpush.bf16.msra.mxu0 %v476
      %565 = vmatpush.bf16.msra.mxu0 %v474
      %566 = vmatpush.bf16.msra.mxu0 %v472
      %567 = vmatpush.bf16.msra.mxu0 %v470
      %568 = vmatpush.bf16.msra.mxu0 %v468
      %569 = vmatpush.bf16.msra.mxu0 %v466
      %570 = vmatmul.bf16.gmra.mxu0 %v310
      %v571 = vpop.f32.mrf.mxu0
      %v572 = vadd.f32 %v273, %v571
      %v573 = vpop.f32.mrf.mxu0
      %v574 = vadd.f32 %v278, %v573
      %575 = vmatmul.bf16.gmra.mxu0 %v313
      %v576 = vpop.f32.mrf.mxu0
      %v577 = vadd.f32 %v283, %v576
      %v578 = vpop.f32.mrf.mxu0
      %v579 = vadd.f32 %v288, %v578
      %580 = vdwg.mxu0
      %581 = vmatpush.bf16.msra.mxu0 %v496
      %582 = vmatpush.bf16.msra.mxu0 %v494
      %583 = vmatpush.bf16.msra.mxu0 %v492
      %584 = vmatpush.bf16.msra.mxu0 %v490
      %585 = vmatpush.bf16.msra.mxu0 %v488
      %586 = vmatpush.bf16.msra.mxu0 %v486
      %587 = vmatpush.bf16.msra.mxu0 %v484
      %588 = vmatpush.bf16.msra.mxu0 %v482
      %589 = vmatmul.bf16.gmra.mxu0 %v311
      %v590 = vpop.f32.mrf.mxu0
      %v591 = vadd.f32 %v572, %v590
      %v592 = vpop.f32.mrf.mxu0
      %v593 = vadd.f32 %v574, %v592
      %594 = vmatmul.bf16.gmra.mxu0 %v314
      %v595 = vpop.f32.mrf.mxu0
      %v596 = vadd.f32 %v577, %v595
      %v597 = vpop.f32.mrf.mxu0
      %v598 = vadd.f32 %v579, %v597
      %599 = vdwg.mxu0
      %600 = vmatpush.bf16.msra.mxu0 %v512
      %601 = vmatpush.bf16.msra.mxu0 %v510
      %602 = vmatpush.bf16.msra.mxu0 %v508
      %603 = vmatpush.bf16.msra.mxu0 %v506
      %604 = vmatpush.bf16.msra.mxu0 %v504
      %605 = vmatpush.bf16.msra.mxu0 %v502
      %606 = vmatpush.bf16.msra.mxu0 %v500
      %607 = vmatpush.bf16.msra.mxu0 %v498
      %608 = vmatmul.bf16.gmra.mxu0 %v312
      %v609 = vpop.f32.mrf.mxu0
      %v610 = vadd.f32 %v591, %v609
      %v611 = vpop.f32.mrf.mxu0
      %v612 = vadd.f32 %v593, %v611
      %613 = vmatmul.bf16.gmra.mxu0 %v315
      %v614 = vpop.f32.mrf.mxu0
      %v615 = vadd.f32 %v596, %v614
      %v616 = vpop.f32.mrf.mxu0
      %v617 = vadd.f32 %v598, %v616
      %618 = vdwg.mxu0
      %619 = vmatpush.bf16.msra.mxu0 %v481
      %620 = vmatpush.bf16.msra.mxu0 %v479
      %621 = vmatpush.bf16.msra.mxu0 %v477
      %622 = vmatpush.bf16.msra.mxu0 %v475
      %623 = vmatpush.bf16.msra.mxu0 %v473
      %624 = vmatpush.bf16.msra.mxu0 %v471
      %625 = vmatpush.bf16.msra.mxu0 %v469
      %626 = vmatpush.bf16.msra.mxu0 %v467
      %627 = vmatmul.bf16.gmra.mxu0 %v310
      %v628 = vpop.f32.mrf.mxu0
      %v629 = vadd.f32 %v273, %v628
      %v630 = vpop.f32.mrf.mxu0
      %v631 = vadd.f32 %v278, %v630
      %632 = vmatmul.bf16.gmra.mxu0 %v313
      %v633 = vpop.f32.mrf.mxu0
      %v634 = vadd.f32 %v283, %v633
      %v635 = vpop.f32.mrf.mxu0
      %v636 = vadd.f32 %v288, %v635
      %637 = vdwg.mxu0
      %638 = vmatpush.bf16.msra.mxu0 %v497
      %639 = vmatpush.bf16.msra.mxu0 %v495
      %640 = vmatpush.bf16.msra.mxu0 %v493
      %641 = vmatpush.bf16.msra.mxu0 %v491
      %642 = vmatpush.bf16.msra.mxu0 %v489
      %643 = vmatpush.bf16.msra.mxu0 %v487
      %644 = vmatpush.bf16.msra.mxu0 %v485
      %645 = vmatpush.bf16.msra.mxu0 %v483
      %646 = vmatmul.bf16.gmra.mxu0 %v311
      %v647 = vpop.f32.mrf.mxu0
      %v648 = vadd.f32 %v629, %v647
      %v649 = vpop.f32.mrf.mxu0
      %v650 = vadd.f32 %v631, %v649
      %651 = vmatmul.bf16.gmra.mxu0 %v314
      %v652 = vpop.f32.mrf.mxu0
      %v653 = vadd.f32 %v634, %v652
      %v654 = vpop.f32.mrf.mxu0
      %v655 = vadd.f32 %v636, %v654
      %656 = vdwg.mxu0
      %657 = vmatpush.bf16.msra.mxu0 %v513
      %658 = vmatpush.bf16.msra.mxu0 %v511
      %659 = vmatpush.bf16.msra.mxu0 %v509
      %660 = vmatpush.bf16.msra.mxu0 %v507
      %661 = vmatpush.bf16.msra.mxu0 %v505
      %662 = vmatpush.bf16.msra.mxu0 %v503
      %663 = vmatpush.bf16.msra.mxu0 %v501
      %664 = vmatpush.bf16.msra.mxu0 %v499
      %665 = vmatmul.bf16.gmra.mxu0 %v312
      %v666 = vpop.f32.mrf.mxu0
      %v667 = vadd.f32 %v648, %v666
      %v668 = vpop.f32.mrf.mxu0
      %v669 = vadd.f32 %v650, %v668
      %670 = vmatmul.bf16.gmra.mxu0 %v315
      %v671 = vpop.f32.mrf.mxu0
      %v672 = vadd.f32 %v653, %v671
      %v673 = vpop.f32.mrf.mxu0
      %v674 = vadd.f32 %v655, %v673
      %675 = vdwg.mxu0
      %676 = vst [vmem:[%s208] sm:$0xff] %v610
      %677 = vst [vmem:[%s208 + $0x8] sm:$0xff] %v667
      %678 = vst [vmem:[%s208 + $0x10] sm:$0xff] %v612
      %679 = vst [vmem:[%s208 + $0x18] sm:$0xff] %v669
      %680 = vst [vmem:[%s208 + $0x20] sm:$0xff] %v615
      %681 = vst [vmem:[%s208 + $0x28] sm:$0xff] %v672
      %682 = vst [vmem:[%s208 + $0x30] sm:$0xff] %v617
      %683 = vst [vmem:[%s208 + $0x38] sm:$0xff] %v674
      %s684 = smul.u32 2, %s19
      %p685 = scmp.lt.s32.totalorder %s18, 1
      %s686 = scalar_select %p685, %s18, 1
      %p687 = scmp.lt.s32.totalorder %s684, 1
      %s688 = scalar_select %p687, %s684, 1
      %s689 = smul.addr %s686, 8
      %s690 = sadd.s32 %s688, %s689
      %s691 = smul.addr %s690, 8
      %s692 = scalar_lea.vmem %s3, %s691
      // Predicated region
      $region33: #{d4_group_conv2d_packed.1} parent=31 // pred_check
        %p693 = pneg %p116
      $region34: #{d4_group_conv2d_packed.1} parent=31 // pred_check_branch
        %695 = sbr.rel (%p693) target = $region36
      $region35: #{d4_group_conv2d_packed.1} parent=31 // pred_region
        %s696 = smul.u32 2, %s19
      $region36: #{d4_group_conv2d_packed.1} parent=31 // pred_fallthru
        _
    $region32: #{d4_group_conv2d_packed.1} parent=5 // pred_fallthru
      _
    %p697 = scmp.le.s32.totalorder 2, %s9
    // Predicated region
    $region37: #{d4_group_conv2d_packed.1} parent=5 // pred_check
      %p698 = pneg %p697
    $region38: #{d4_group_conv2d_packed.1} parent=5 // pred_check_branch
      %700 = sbr.rel (%p698) target = $region40
    $region39: #{d4_group_conv2d_packed.1} parent=5 // pred_region
      %s701 = ssub.s32 %s9, 2
      // Predicated region
      $region41: #{d4_group_conv2d_packed.1} parent=39 // pred_check
        %p702 = pneg %p122
      $region42: #{d4_group_conv2d_packed.1} parent=39 // pred_check_branch
        %704 = sbr.rel (%p702) target = $region44
      $region43: #{d4_group_conv2d_packed.1} parent=39 // pred_region
        %s705 = smul.u32 2, %s21
        %p706 = scmp.lt.s32.totalorder %s20, 1
        %s707 = scalar_select %p706, %s20, 1
        %p708 = scmp.lt.s32.totalorder %s705, 1
        %s709 = scalar_select %p708, %s705, 1
        %s710 = smul.addr %s707, 8
        %s711 = sadd.s32 %s709, %s710
        %s712 = smul.addr %s711, 8
        %s713 = scalar_lea.vmem %s3, %s712
      $region44: #{d4_group_conv2d_packed.1} parent=39 // pred_fallthru
        _
    $region40: #{d4_group_conv2d_packed.1} parent=5 // pred_fallthru
      _
  $region6: #{d4_group_conv2d_packed.1} parent=0 // loop_footer
    %s13 = sadd.s32 1, %s9
  $region7: #{d4_group_conv2d_packed.1} parent=0 // loop_footer_branch
    %8 = sbr.rel target = $region3
  $region8: #{d4_group_conv2d_packed.1} parent=0 // loop_exit
    _

</llo_original>
